<compile_context>
chip_gen: v6e
topology: v6e:2x2x1
jax: 0.10.0
libtpu: 0.0.40
codegen_flags: <defaults>
</compile_context>

<pallas_src>
import jax
import jax.numpy as jnp
from jax.experimental import pallas as pl
from jax.experimental.pallas import tpu as pltpu


def _draw_randoms(key, shape, dtype, *, sigma, p):
    """Per-sample gate folded with sigma (scale = mask * sigma) and the
    Gaussian noise field, matching torch.rand(B,1,1) < p and torch.randn(x)."""
    B = shape[0]
    k_mask, k_noise = jax.random.split(key)
    gate = jax.random.uniform(k_mask, (B,), dtype=jnp.float32) < jnp.float32(p)
    scale = jnp.where(gate, jnp.float32(sigma), jnp.float32(0.0)).astype(dtype)
    noise = jax.random.normal(k_noise, shape, dtype=dtype)
    return scale, noise


def _pick_block(total: int, align: int, max_block: int) -> int:
    """Largest divisor of `total` that is <= max_block and a multiple of
    `align` (TPU (8, 128) tiling rule); falls back to the full dimension
    (always legal: block == full array dim)."""
    if total <= max_block:
        return total
    best = 0
    d = align
    while d <= max_block:
        if total % d == 0:
            best = d
        d += align
    return best if best > 0 else total


def _jitter_kernel(x_ref, noise_ref, scale_ref, o_ref):
    # scale_ref is (Bblk, 1): per-sample (mask * sigma), broadcast along lanes.
    # Single fused FMA per element: out = x + noise * scale.
    o_ref[...] = (x_ref[...] + noise_ref[...] * scale_ref[...]).astype(o_ref.dtype)


def jitter(x, key, *, sigma=0.5, p=0.5):
    """Pallas implementation of Jitter.forward. x: (B, T, C)."""
    B, T, C = x.shape
    N = T * C
    itemsize = jnp.dtype(x.dtype).itemsize

    scale, noise = _draw_randoms(key, x.shape, x.dtype, sigma=sigma, p=p)

    # Lane-dense flatten (zero-cost, row-major): last dim becomes T*C.
    x2 = x.reshape(B, N)
    noise2 = noise.reshape(B, N)
    scale2 = scale.reshape(B, 1)

    # Block sizing: lane dim up to 8192 (multiple of 128), then as many batch
    # rows (multiple of 8, or all of B) as fit ~1 MiB per input block.
    nblk = _pick_block(N, 128, 8192)
    rows = max(1, (1 << 20) // (nblk * itemsize))
    bblk = _pick_block(B, 8, rows)

    grid = (B // bblk, N // nblk)

    y2 = pl.pallas_call(
        _jitter_kernel,
        out_shape=jax.ShapeDtypeStruct((B, N), x.dtype),
        grid=grid,
        in_specs=[
            pl.BlockSpec((bblk, nblk), lambda i, j: (i, j)),   # x
            pl.BlockSpec((bblk, nblk), lambda i, j: (i, j)),   # noise
            pl.BlockSpec((bblk, 1), lambda i, j: (i, 0)),      # per-sample scale
        ],
        out_specs=pl.BlockSpec((bblk, nblk), lambda i, j: (i, j)),
        compiler_params=pltpu.CompilerParams(
            dimension_semantics=("parallel", "parallel")),
    )(x2, noise2, scale2)

    return y2.reshape(B, T, C)


if __name__ == "__main__":
    key = jax.random.PRNGKey(0)
    kx, kr = jax.random.split(key)

    B, T, C = 4, 16, 32
    sigma, p = 0.5, 0.5
    x = jax.random.normal(kx, (B, T, C), dtype=jnp.float32)

    y = jitter(x, kr, sigma=sigma, p=p)
    y = jax.block_until_ready(y)

    # Pure-JAX reference with the same randoms (same key -> same draws).
    scale_ref, noise_ref = _draw_randoms(kr, x.shape, x.dtype, sigma=sigma, p=p)
    ref = x + noise_ref * scale_ref.reshape(B, 1, 1)

    assert y.shape == x.shape and y.dtype == x.dtype
    assert bool(jnp.all(jnp.isfinite(y)))
    assert bool(jnp.allclose(y, ref, rtol=1e-6, atol=1e-6))
    print("KERNEL_OK")
</pallas_src>

<mosaic_0001>
module attributes {stable_mosaic.version = 11 : i64} {
  func.func @_jitter_kernel(%arg0: i32, %arg1: i32, %arg2: memref<4x512xf32, #tpu.memory_space<vmem>>, %arg3: memref<4x512xf32, #tpu.memory_space<vmem>>, %arg4: memref<4x1xf32, #tpu.memory_space<vmem>>, %arg5: memref<4x512xf32, #tpu.memory_space<vmem>>) attributes {dimension_semantics = [#tpu.dimension_semantics<parallel>, #tpu.dimension_semantics<parallel>], iteration_bounds = array<i64: 1, 1>, scalar_prefetch = 0 : i64, scratch_operands = 0 : i64, tpu.core_type = #tpu.core_type<tc>, window_params = [{transform_indices = @transform_0, window_bounds = array<i64: 4, 512>}, {transform_indices = @transform_1, window_bounds = array<i64: 4, 512>}, {transform_indices = @transform_2, window_bounds = array<i64: 4, 1>}, {transform_indices = @transform_3, window_bounds = array<i64: 4, 512>}]} {
    %c0 = arith.constant 0 : index
    %c0_0 = arith.constant 0 : index
    %0 = vector.load %arg2[%c0, %c0_0] : memref<4x512xf32, #tpu.memory_space<vmem>>, vector<4x512xf32>
    %c0_1 = arith.constant 0 : index
    %c0_2 = arith.constant 0 : index
    %1 = vector.load %arg3[%c0_1, %c0_2] : memref<4x512xf32, #tpu.memory_space<vmem>>, vector<4x512xf32>
    %c0_3 = arith.constant 0 : index
    %c0_4 = arith.constant 0 : index
    %2 = vector.load %arg4[%c0_3, %c0_4] : memref<4x1xf32, #tpu.memory_space<vmem>>, vector<4x1xf32>
    %3 = vector.broadcast %2 : vector<4x1xf32> to vector<4x512xf32>
    %4 = arith.mulf %1, %3 : vector<4x512xf32>
    %5 = arith.addf %0, %4 : vector<4x512xf32>
    %c0_5 = arith.constant 0 : index
    %c0_6 = arith.constant 0 : index
    %6 = vector.load %arg5[%c0_5, %c0_6] : memref<4x512xf32, #tpu.memory_space<vmem>>, vector<4x512xf32>
    tpu.vector_store %arg5[%c0_5, %c0_6], %5 {strides = array<i32>} : memref<4x512xf32, #tpu.memory_space<vmem>>, vector<4x512xf32>,
    return
  }
  func.func @transform_0(%arg0: i32, %arg1: i32) -> (i32, i32) {
    %c0_i32 = arith.constant 0 : i32
    return %arg0, %arg1 : i32, i32
  }
  func.func @transform_1(%arg0: i32, %arg1: i32) -> (i32, i32) {
    %c0_i32 = arith.constant 0 : i32
    return %arg0, %arg1 : i32, i32
  }
  func.func @transform_2(%arg0: i32, %arg1: i32) -> (i32, i32) {
    %c0_i32 = arith.constant 0 : i32
    %c0_i32_0 = arith.constant 0 : i32
    return %arg0, %c0_i32 : i32, i32
  }
  func.func @transform_3(%arg0: i32, %arg1: i32) -> (i32, i32) {
    %c0_i32 = arith.constant 0 : i32
    return %arg0, %arg1 : i32, i32
  }
}

</mosaic_0001>

<llo_original>
// kernel: tpu_custom_call.1
$region0: #{tpu_custom_call.1}
  #allocation0 [shape = 'u32[]', space=smem, size = 0x4, offset = 0x4, fixed_abs, tag = 'smem constant byte address 0x4 - core index']
  #allocation1 [shape = 'u32[144,128]{1,0:T(1,128)}', space=vmem, size = 0x12000, scoped, tag = 'internal scratch']
  %s0 = inlined_call_operand.hbm [shape: f32[4,512], index: 0, kind: input, shape index: {}]
  %s1 = inlined_call_operand.hbm [shape: f32[4,512], index: 1, kind: input, shape index: {}]
  %s2 = inlined_call_operand.vmem [shape: f32[4,1], index: 2, kind: input, shape index: {}]
  %s3 = inlined_call_operand.hbm [shape: f32[4,512], index: 3, kind: output, shape index: {}]
  %s4 = sld [smem:[#allocation0]]
  $region30: #{tpu_custom_call.1} parent=0
    _
  %s6 = ssub.s32 1, %s4
  %s7 = scalar_select 0, %s6, %s4
  $region1: #{tpu_custom_call.1} parent=0
    #allocation2 [shape = 'u8[8192]{0}', space=vmem, size = 0x2000, scoped, tag = 'input window, operand 0, single buffered']
    #allocation3 [shape = 's32[1]{0}', space=sflag, size = 0x4, scoped, tag = 'scoped memory for tpu_custom_call.1']
    #allocation4 [shape = 's32[1]{0}', space=sflag, size = 0x4, scoped, tag = 'scoped memory for tpu_custom_call.1']
    #allocation5 [shape = 'u8[8192]{0}', space=vmem, size = 0x2000, scoped, tag = 'input window, operand 1, single buffered']
    #allocation6 [shape = 's32[1]{0}', space=sflag, size = 0x4, scoped, tag = 'scoped memory for tpu_custom_call.1']
    #allocation7 [shape = 'u8[8192]{0}', space=vmem, size = 0x2000, scoped, tag = 'output window, operand 0, single buffered']
    %8 = vsyncpa [#allocation3], 0
    %9 = vsyncpa [#allocation6], 0
    %10 = vsyncpa [#allocation4], 0
    // Predicated region
    $region2: #{tpu_custom_call.1} parent=1 // pred_check
      _
    $region3: #{tpu_custom_call.1} parent=1 // pred_check_branch
      %12 = sbr.rel (0) target = $region5
    $region4: #{tpu_custom_call.1} parent=1 // pred_region
      %s14 = ssub.s32 256, 256
      %15 = vsyncadd [#allocation3], %s14
      %s17 = sshll.u32 [#allocation2], 4
      %s18 = int_to_ptr.vmem [resolvable:$true] %s17
      %20 = dma.hbm_to_vmem [thread:$0]  %s0, 256, %s18, [#allocation3]
    $region5: #{tpu_custom_call.1} parent=1 // pred_fallthru
      _
    // Predicated region
    $region6: #{tpu_custom_call.1} parent=1 // pred_check
      _
    $region7: #{tpu_custom_call.1} parent=1 // pred_check_branch
      %22 = sbr.rel (0) target = $region9
    $region8: #{tpu_custom_call.1} parent=1 // pred_region
      %s24 = ssub.s32 256, 256
      %25 = vsyncadd [#allocation6], %s24
      %s27 = sshll.u32 [#allocation5], 4
      %s28 = int_to_ptr.vmem [resolvable:$true] %s27
      %30 = dma.hbm_to_vmem [thread:$0]  %s1, 256, %s28, [#allocation6]
    $region9: #{tpu_custom_call.1} parent=1 // pred_fallthru
      _
    // Predicated region
    $region10: #{tpu_custom_call.1} parent=1 // pred_check
      _
    $region11: #{tpu_custom_call.1} parent=1 // pred_check_branch
      %32 = sbr.rel (0) target = $region13
    $region12: #{tpu_custom_call.1} parent=1 // pred_region
      _
    $region13: #{tpu_custom_call.1} parent=1 // pred_fallthru
      _
    // Predicated region
    $region14: #{tpu_custom_call.1} parent=1 // pred_check
      _
    $region15: #{tpu_custom_call.1} parent=1 // pred_check_branch
      %34 = sbr.rel (0) target = $region17
    $region16: #{tpu_custom_call.1} parent=1 // pred_region
      %35 = dma.done [#allocation3], 256
    $region17: #{tpu_custom_call.1} parent=1 // pred_fallthru
      _
    // Predicated region
    $region18: #{tpu_custom_call.1} parent=1 // pred_check
      _
    $region19: #{tpu_custom_call.1} parent=1 // pred_check_branch
      %37 = sbr.rel (0) target = $region21
    $region20: #{tpu_custom_call.1} parent=1 // pred_region
      %38 = dma.done [#allocation6], 256
    $region21: #{tpu_custom_call.1} parent=1 // pred_fallthru
      _
    %v39 = vld [vmem:[#allocation2] sm:$0xff]
    %v40 = vld [vmem:[#allocation2 + $0x8] sm:$0xff]
    %v41 = vld [vmem:[#allocation5] sm:$0xff]
    %v42 = vld [vmem:[#allocation5 + $0x8] sm:$0xff]
    %v43 = vld [vmem:[%s2] sm:$0xf]
    %45 = vset.pattern.permute.xlu0 0
    %46 = vperm.xlu0 %45, %v43
    %v47 = vpop.permute.xlu0 %46
    %v49 = vunpack.c.l.s4 839922192
    %v50 = vunpack.c.0.s8 %v49
    %v51 = vlaneseq
    %v52 = vshrl.u32 %v51, 7
    %v53 = vsub.s32 %v50, %v52
    %v54 = vrot.slane %v47, %v53
    %v56 = vmul.f32 %v41, %v54
    %v57 = vmul.f32 %v42, %v54
    %v58 = vadd.f32 %v39, %v56
    %v59 = vadd.f32 %v40, %v57
    %60 = vst [vmem:[#allocation7] sm:$0xff] %v58
    %61 = vst [vmem:[#allocation7 + $0x8] sm:$0xff] %v59
    // Predicated region
    $region22: #{tpu_custom_call.1} parent=1 // pred_check
      _
    $region23: #{tpu_custom_call.1} parent=1 // pred_check_branch
      %63 = sbr.rel (0) target = $region25
    $region24: #{tpu_custom_call.1} parent=1 // pred_region
      %s65 = ssub.s32 256, 256
      %66 = vsyncadd [#allocation4], %s65
      %s68 = sshll.u32 [#allocation7], 4
      %s69 = int_to_ptr.vmem [resolvable:$true] %s68
      %71 = dma.vmem_to_hbm [thread:$0]  %s69, 256, %s3, [#allocation4]
    $region25: #{tpu_custom_call.1} parent=1 // pred_fallthru
      _
    // Predicated region
    $region26: #{tpu_custom_call.1} parent=1 // pred_check
      _
    $region27: #{tpu_custom_call.1} parent=1 // pred_check_branch
      %73 = sbr.rel (0) target = $region29
    $region28: #{tpu_custom_call.1} parent=1 // pred_region
      %74 = dma.done [#allocation4], 256
    $region29: #{tpu_custom_call.1} parent=1 // pred_fallthru
      _
    %75 = vsyncpa [#allocation3], 1
    %76 = vsyncpa [#allocation6], 1
    %77 = vsyncpa [#allocation4], 1

</llo_original>
